<compile_context>
chip_gen: v6e
topology: v6e:2x2x1
jax: 0.10.0
libtpu: 0.0.40
codegen_flags: <defaults>
</compile_context>

<pallas_src>
import jax
import jax.numpy as jnp
from jax.experimental import pallas as pl
from jax.experimental.pallas import tpu as pltpu


def _gelu_tanh(x):
    # GELU with tanh approximation (megablocks DEFAULT_ACTIVATION_FN). tanh -> EUP slot.
    c = jnp.float32(0.7978845608028654)  # sqrt(2/pi)
    return 0.5 * x * (1.0 + jnp.tanh(c * (x + 0.044715 * x * x * x)))


def _mlp_kernel(x_ref, w1_ref, w2_ref, o_ref, acc_ref):
    # Grid axes: (expert e, token-tile i, ffn-tile j).  j carries the down-proj
    # reduction; the output block index is constant along j, so o_ref stays
    # resident and partial products accumulate in the f32 scratch.
    j = pl.program_id(2)

    @pl.when(j == 0)
    def _():
        acc_ref[...] = jnp.zeros_like(acc_ref)

    # up_proj slice: (tm, H) @ (H, tff) -> (tm, tff), f32 accumulation on the MXU.
    h = jnp.dot(x_ref[...], w1_ref[...], preferred_element_type=jnp.float32)
    # Activation is elementwise over FF -> exact when applied per-FF-tile.
    h = _gelu_tanh(h)
    # down_proj partial: (tm, tff) @ (tff, H) -> (tm, H), accumulate in f32.
    acc_ref[...] += jnp.dot(h.astype(w2_ref.dtype), w2_ref[...],
                            preferred_element_type=jnp.float32)

    @pl.when(j == pl.num_programs(2) - 1)
    def _():
        o_ref[...] = acc_ref[...].astype(o_ref.dtype)


def _ceil_to(a, b):
    return ((a + b - 1) // b) * b


def _pick_tff(FF, H, tm, itemsize, vmem_budget):
    """Largest FF tile that divides FF, is a multiple of 128 (or == FF), and whose
    double-buffered VMEM footprint fits the budget."""
    cands = [d for d in range(128, FF + 1, 128) if FF % d == 0]
    if not cands:
        cands = [FF]
    best = cands[0]
    for tff in cands:
        # 2x double-buffer for the streamed w1/w2/x/out tiles + f32 accumulator.
        bytes_needed = (2 * (H * tff + tff * H + tm * H + tm * H) * itemsize
                        + tm * H * 4)
        if bytes_needed <= vmem_budget:
            best = tff
    return best


def moe_mlp(x, w1, w2, *, tm=256, tff=None, vmem_limit_bytes=96 * 1024 * 1024):
    """Expert-batched MLP forward.

    x: (E, T, H); w1: (E, H, FF); w2: (E, FF, H)  ->  (E, T, H)
    """
    E, T, H = x.shape
    FF = w1.shape[-1]
    assert w1.shape == (E, H, FF), w1.shape
    assert w2.shape == (E, FF, H), w2.shape

    # ---- token tile: pad T so the grid divides evenly (zero rows are harmless:
    # no bias, gelu(0) = 0, and padded rows are sliced away). ----
    if tm >= T:
        tm = T
        Tp = T
    else:
        tm = _ceil_to(tm, 8)
        Tp = _ceil_to(T, tm)
    if Tp != T:
        x = jnp.pad(x, ((0, 0), (0, Tp - T), (0, 0)))

    itemsize = x.dtype.itemsize

    # ---- FF tile: auto-pick the largest divisor of FF (multiple of 128) that
    # keeps the pipelined VMEM footprint well under the limit. ----
    if tff is None:
        tff = _pick_tff(FF, H, tm, itemsize, vmem_budget=vmem_limit_bytes // 2)
    elif not (FF % tff == 0 and (tff % 128 == 0 or tff == FF)):
        cands = [d for d in range(128, min(tff, FF) + 1, 128) if FF % d == 0]
        tff = cands[-1] if cands else FF

    grid = (E, Tp // tm, FF // tff)

    cost = pl.CostEstimate(
        flops=2 * 2 * E * Tp * H * FF,                 # two GEMMs
        transcendentals=E * Tp * FF,                    # one tanh per gelu element
        bytes_accessed=(x.size * itemsize
                        + w1.size * w1.dtype.itemsize
                        + w2.size * w2.dtype.itemsize
                        + E * Tp * H * itemsize),
    )

    out = pl.pallas_call(
        _mlp_kernel,
        out_shape=jax.ShapeDtypeStruct((E, Tp, H), x.dtype),
        grid_spec=pltpu.PrefetchScalarGridSpec(
            num_scalar_prefetch=0,
            grid=grid,
            in_specs=[
                # x token tile (expert dim squeezed); constant along j -> stays resident.
                pl.BlockSpec((None, tm, H), lambda e, i, j: (e, i, 0)),
                # w1 streamed as (H, tff) tiles along the FF reduction.
                pl.BlockSpec((None, H, tff), lambda e, i, j: (e, 0, j)),
                # w2 streamed as (tff, H) tiles along the FF reduction.
                pl.BlockSpec((None, tff, H), lambda e, i, j: (e, j, 0)),
            ],
            out_specs=pl.BlockSpec((None, tm, H), lambda e, i, j: (e, i, 0)),
            scratch_shapes=[pltpu.VMEM((tm, H), jnp.float32)],
        ),
        compiler_params=pltpu.CompilerParams(
            dimension_semantics=("parallel", "parallel", "arbitrary"),
            vmem_limit_bytes=vmem_limit_bytes,
        ),
        cost_estimate=cost,
    )(x, w1, w2)

    if Tp != T:
        out = out[:, :T, :]
    return out


def moe_mlp_ref(x, w1, w2):
    # Pure-JAX reference (f32, highest matmul precision).
    xf = x.astype(jnp.float32)
    h = jnp.einsum("eth,ehf->etf", xf, w1.astype(jnp.float32),
                   precision=jax.lax.Precision.HIGHEST)
    h = _gelu_tanh(h)
    return jnp.einsum("etf,efh->eth", h, w2.astype(jnp.float32),
                      precision=jax.lax.Precision.HIGHEST)


if __name__ == "__main__":
    # Small shapes consistent with the module: experts_per_rank=2, 24 tokens per
    # expert (ragged vs. the 16-row token tile -> exercises padding), hidden=32,
    # ffn_hidden=256 (with tff=128 -> exercises the FF reduction/accumulator path).
    E, T, H, FF = 2, 24, 32, 256

    key = jax.random.PRNGKey(0)
    kx, k1, k2 = jax.random.split(key, 3)
    x = jax.random.normal(kx, (E, T, H), dtype=jnp.float32)
    w1 = jax.random.normal(k1, (E, H, FF), dtype=jnp.float32) * 0.05
    w2 = jax.random.normal(k2, (E, FF, H), dtype=jnp.float32) * 0.05

    # f32 run (tight correctness check), forced small tiles to exercise padding +
    # the multi-step FF reduction.
    out = jax.block_until_ready(moe_mlp(x, w1, w2, tm=16, tff=128))
    ref = moe_mlp_ref(x, w1, w2)
    assert out.shape == (E, T, H)
    assert jnp.allclose(out, ref, atol=1e-4, rtol=1e-4), "f32 mismatch vs reference"

    # Auto-tiled path (production defaults: tff auto-picked from VMEM budget).
    out_auto = jax.block_until_ready(moe_mlp(x, w1, w2))
    assert jnp.allclose(out_auto, ref, atol=1e-4, rtol=1e-4), "auto-tile mismatch"

    # bf16 run (production dtype: bf16 on the MXU, f32 accumulation / GELU).
    xb, w1b, w2b = (a.astype(jnp.bfloat16) for a in (x, w1, w2))
    outb = jax.block_until_ready(moe_mlp(xb, w1b, w2b, tm=16, tff=128))
    refb = moe_mlp_ref(xb, w1b, w2b)
    assert jnp.allclose(outb.astype(jnp.float32), refb, atol=2e-2, rtol=2e-2), \
        "bf16 mismatch vs reference"

    # TODO(synk): ScaleGradient (backward-only grad scaling) and resolve_dtensor
    # (DTensor unwrapping) are identity in forward and not kernelized.
    print("KERNEL_OK")
</pallas_src>

<mosaic_0001>
module attributes {stable_mosaic.version = 11 : i64} {
  func.func @_mlp_kernel(%arg0: i32, %arg1: i32, %arg2: i32, %arg3: memref<1x16x32xf32, #tpu.memory_space<vmem>>, %arg4: memref<1x32x128xf32, #tpu.memory_space<vmem>>, %arg5: memref<1x128x32xf32, #tpu.memory_space<vmem>>, %arg6: memref<1x16x32xf32, #tpu.memory_space<vmem>>, %arg7: memref<16x32xf32, #tpu.memory_space<vmem>>) attributes {dimension_semantics = [#tpu.dimension_semantics<parallel>, #tpu.dimension_semantics<parallel>, #tpu.dimension_semantics<arbitrary>], iteration_bounds = array<i64: 2, 2, 2>, scalar_prefetch = 0 : i64, scratch_operands = 1 : i64, tpu.core_type = #tpu.core_type<tc>, window_params = [{transform_indices = @transform_0, window_bounds = array<i64: 1, 16, 32>}, {transform_indices = @transform_1, window_bounds = array<i64: 1, 32, 128>}, {transform_indices = @transform_2, window_bounds = array<i64: 1, 128, 32>}, {transform_indices = @transform_3, window_bounds = array<i64: 1, 16, 32>}]} {
    %c0_i32 = arith.constant 0 : i32
    %0 = arith.cmpi eq, %arg2, %c0_i32 : i32
    %1 = arith.extui %0 : i1 to i32
    %c0_i32_0 = arith.constant 0 : i32
    %2 = arith.cmpi ne, %1, %c0_i32_0 : i32
    scf.if %2 {
      %cst_19 = arith.constant 0.000000e+00 : f32
      %30 = vector.broadcast %cst_19 : f32 to vector<16x32xf32>
      %c0_20 = arith.constant 0 : index
      %c0_21 = arith.constant 0 : index
      %31 = vector.load %arg7[%c0_20, %c0_21] : memref<16x32xf32, #tpu.memory_space<vmem>>, vector<16x32xf32>
      tpu.vector_store %arg7[%c0_20, %c0_21], %30 {strides = array<i32>} : memref<16x32xf32, #tpu.memory_space<vmem>>, vector<16x32xf32>,
    } else {
    }
    %c0 = arith.constant 0 : index
    %c0_1 = arith.constant 0 : index
    %c0_2 = arith.constant 0 : index
    %3 = vector.load %arg3[%c0, %c0_1, %c0_2] : memref<1x16x32xf32, #tpu.memory_space<vmem>>, vector<1x16x32xf32>
    %4 = vector.shape_cast %3 : vector<1x16x32xf32> to vector<16x32xf32>
    %c0_3 = arith.constant 0 : index
    %c0_4 = arith.constant 0 : index
    %c0_5 = arith.constant 0 : index
    %5 = vector.load %arg4[%c0_3, %c0_4, %c0_5] : memref<1x32x128xf32, #tpu.memory_space<vmem>>, vector<1x32x128xf32>
    %6 = vector.shape_cast %5 : vector<1x32x128xf32> to vector<32x128xf32>
    %cst = arith.constant dense<0.000000e+00> : vector<16x128xf32>
    %7 = tpu.matmul %4, %6, %cst {dimension_numbers = #tpu.dot_dimension_numbers<[1], [0], [0], [1], [0, 0, 1, 1], [], []>} : vector<16x32xf32>, vector<32x128xf32>, vector<16x128xf32> -> vector<16x128xf32>
    %cst_6 = arith.constant 5.000000e-01 : f32
    %8 = vector.broadcast %cst_6 : f32 to vector<16x128xf32>
    %9 = arith.mulf %8, %7 : vector<16x128xf32>
    %cst_7 = arith.constant 4.471500e-02 : f32
    %10 = vector.broadcast %cst_7 : f32 to vector<16x128xf32>
    %11 = arith.mulf %10, %7 : vector<16x128xf32>
    %12 = arith.mulf %11, %7 : vector<16x128xf32>
    %13 = arith.mulf %12, %7 : vector<16x128xf32>
    %14 = arith.addf %7, %13 : vector<16x128xf32>
    %cst_8 = arith.constant 0.797884583 : f32
    %15 = vector.broadcast %cst_8 : f32 to vector<16x128xf32>
    %16 = arith.mulf %15, %14 : vector<16x128xf32>
    %17 = math.tanh %16 : vector<16x128xf32>
    %cst_9 = arith.constant 1.000000e+00 : f32
    %18 = vector.broadcast %cst_9 : f32 to vector<16x128xf32>
    %19 = arith.addf %18, %17 : vector<16x128xf32>
    %20 = arith.mulf %9, %19 : vector<16x128xf32>
    %c0_10 = arith.constant 0 : index
    %c0_11 = arith.constant 0 : index
    %21 = vector.load %arg7[%c0_10, %c0_11] : memref<16x32xf32, #tpu.memory_space<vmem>>, vector<16x32xf32>
    %c0_12 = arith.constant 0 : index
    %c0_13 = arith.constant 0 : index
    %c0_14 = arith.constant 0 : index
    %22 = vector.load %arg5[%c0_12, %c0_13, %c0_14] : memref<1x128x32xf32, #tpu.memory_space<vmem>>, vector<1x128x32xf32>
    %23 = vector.shape_cast %22 : vector<1x128x32xf32> to vector<128x32xf32>
    %cst_15 = arith.constant dense<0.000000e+00> : vector<16x32xf32>
    %24 = tpu.matmul %20, %23, %cst_15 {dimension_numbers = #tpu.dot_dimension_numbers<[1], [0], [0], [1], [0, 0, 1, 1], [], []>} : vector<16x128xf32>, vector<128x32xf32>, vector<16x32xf32> -> vector<16x32xf32>
    %25 = arith.addf %21, %24 : vector<16x32xf32>
    %c0_16 = arith.constant 0 : index
    %c0_17 = arith.constant 0 : index
    %26 = vector.load %arg7[%c0_16, %c0_17] : memref<16x32xf32, #tpu.memory_space<vmem>>, vector<16x32xf32>
    tpu.vector_store %arg7[%c0_16, %c0_17], %25 {strides = array<i32>} : memref<16x32xf32, #tpu.memory_space<vmem>>, vector<16x32xf32>,
    %c1_i32 = arith.constant 1 : i32
    %27 = arith.cmpi eq, %arg2, %c1_i32 : i32
    %28 = arith.extui %27 : i1 to i32
    %c0_i32_18 = arith.constant 0 : i32
    %29 = arith.cmpi ne, %28, %c0_i32_18 : i32
    scf.if %29 {
      %c0_19 = arith.constant 0 : index
      %c0_20 = arith.constant 0 : index
      %30 = vector.load %arg7[%c0_19, %c0_20] : memref<16x32xf32, #tpu.memory_space<vmem>>, vector<16x32xf32>
      %c0_21 = arith.constant 0 : index
      %c0_22 = arith.constant 0 : index
      %c0_23 = arith.constant 0 : index
      %31 = vector.load %arg6[%c0_21, %c0_22, %c0_23] : memref<1x16x32xf32, #tpu.memory_space<vmem>>, vector<1x16x32xf32>
      %32 = vector.shape_cast %31 : vector<1x16x32xf32> to vector<16x32xf32>
      %33 = vector.shape_cast %30 : vector<16x32xf32> to vector<1x16x32xf32>
      tpu.vector_store %arg6[%c0_21, %c0_22, %c0_23], %33 {strides = array<i32>} : memref<1x16x32xf32, #tpu.memory_space<vmem>>, vector<1x16x32xf32>,
    } else {
    }
    return
  }
  func.func @transform_0(%arg0: i32, %arg1: i32, %arg2: i32) -> (i32, i32, i32) {
    %c0_i32 = arith.constant 0 : i32
    %c0_i32_0 = arith.constant 0 : i32
    return %arg0, %arg1, %c0_i32 : i32, i32, i32
  }
  func.func @transform_1(%arg0: i32, %arg1: i32, %arg2: i32) -> (i32, i32, i32) {
    %c0_i32 = arith.constant 0 : i32
    %c0_i32_0 = arith.constant 0 : i32
    return %arg0, %c0_i32, %arg2 : i32, i32, i32
  }
  func.func @transform_2(%arg0: i32, %arg1: i32, %arg2: i32) -> (i32, i32, i32) {
    %c0_i32 = arith.constant 0 : i32
    %c0_i32_0 = arith.constant 0 : i32
    return %arg0, %arg2, %c0_i32 : i32, i32, i32
  }
  func.func @transform_3(%arg0: i32, %arg1: i32, %arg2: i32) -> (i32, i32, i32) {
    %c0_i32 = arith.constant 0 : i32
    %c0_i32_0 = arith.constant 0 : i32
    return %arg0, %arg1, %c0_i32 : i32, i32, i32
  }
}

</mosaic_0001>

<llo_original>
// kernel: tpu_custom_call.1
$region0: #{tpu_custom_call.1}
  #allocation0 [shape = 'u32[]', space=smem, size = 0x4, offset = 0x4, fixed_abs, tag = 'smem constant byte address 0x4 - core index']
  #allocation1 [shape = 'u32[144,128]{1,0:T(1,128)}', space=vmem, size = 0x12000, scoped, tag = 'internal scratch']
  #allocation2 [shape = 'f32[16,32]{1,0:T(8,128)}', space=vmem, size = 0x2000, scoped, tag = 'scratch operand']
  %s0 = inlined_call_operand.vmem [shape: f32[2,32,32], index: 0, kind: input, shape index: {}]
  %s1 = inlined_call_operand.vmem [shape: f32[2,32,256], index: 1, kind: input, shape index: {}]
  %s2 = inlined_call_operand.vmem [shape: f32[2,256,32], index: 2, kind: input, shape index: {}]
  %s3 = inlined_call_operand.hbm [shape: f32[2,32,32], index: 3, kind: output, shape index: {}]
  %s4 = sld [smem:[#allocation0]]
  $region91: #{tpu_custom_call.1} parent=0
    _
  %s6 = ssub.s32 1, %s4
  %s7 = scalar_select 0, %s6, %s4
  $region1: #{tpu_custom_call.1} parent=0
    #allocation3 [shape = 'u8[32768]{0}', space=vmem, size = 0x8000, scoped, tag = 'input window, operand 1']
    #allocation4 [shape = 'u8[16384]{0}', space=vmem, size = 0x4000, scoped, tag = 'output window, operand 0']
    #allocation5 [shape = 's32[2]{0}', space=sflag, size = 0x8, scoped, tag = 'scoped memory for tpu_custom_call.1']
    %8 = vsyncpa [#allocation5], 0
    %s9 = scalar_lea.sflag [#allocation5], 1
    %10 = vsyncpa %s9, 0
    loop: start=0, step=1, limit=10
    $region2: #{tpu_custom_call.1} parent=1 // loop_pre_header
      _
    $region3: #{tpu_custom_call.1} parent=1 // loop_header
      %s12 = sphi 0, %s16
      %p13 = scmp.ge.s32.totalorder %s12, 10
      %s19 = sphi 0, %s38
      %s20 = sphi 0, %s34
      %s21 = sphi 0, %s30
      %s22 = sphi 0, %s19
      %s23 = sphi 0, %s20
      %s24 = sphi 0, %s21
      %s25 = sphi 0, %s22
      %s26 = sphi 0, %s23
      %s27 = sphi 0, %s24
      %s43 = sphi 0, %s45
      %s46 = sphi 0, %s43
      %s47 = sphi 0, %s46
      %s63 = sphi 0, %s47
      %s71 = sphi 0, %s73
      %s74 = sphi 0, %s71
      %s75 = sphi 0, %s74
      %s91 = sphi 0, %s75
      %s99 = sphi 0, %s101
      %s102 = sphi 0, %s99
      %s103 = sphi 0, %s102
      %s119 = sphi 0, %s103
      %s127 = sphi 0, %s129
      %s130 = sphi 0, %s127
      %s131 = sphi 0, %s130
      %s147 = sphi 0, %s131
    $region4: #{tpu_custom_call.1} parent=1 // loop_header_branch
      %15 = sbr.rel (%p13) target = $region8
    $region5: #{tpu_custom_call.1} parent=1 // loop_body
      %s17 = ssub.s32 %s12, 1
      %s18 = ssub.s32 %s12, 2
      %s28 = sadd.s32 1, %s21
      %p29 = scmp.ge.s32.totalorder %s28, 2
      %s30 = scalar_select %p29, 0, %s28
      %s31 = sadd.s32 1, %s20
      %s32 = scalar_select %p29, %s31, %s20
      %p33 = scmp.ge.s32.totalorder %s32, 2
      %s34 = scalar_select %p33, 0, %s32
      %s35 = sadd.s32 1, %s19
      %s36 = scalar_select %p33, %s35, %s19
      %p37 = scmp.ge.s32.totalorder %s36, 2
      %s38 = scalar_select %p37, 0, %s36
      %s39 = ssub.s32 %s19, %s38
      %s40 = ssub.s32 %s20, %s34
      %s41 = sor.u32 %s39, %s40
      %p42 = scmp.eq.s32.totalorder %s41, 0
      %s44 = sadd.s32 %s43, 1
      %s45 = scalar_select %p42, %s43, %s44
      %p48 = pneg %p42
      %p49 = scmp.eq.s32.totalorder %s12, 7
      %p50 = por %p48, %p49
      %p51 = scmp.ne.s32.totalorder %s43, %s46
      %p52 = scmp.eq.s32.totalorder %s12, 0
      %p53 = por %p51, %p52
      %p54 = scmp.ne.s32.totalorder %s43, %s46
      %p55 = scmp.eq.s32.totalorder %s17, 7
      %p56 = por %p54, %p55
      %p57 = scmp.ne.s32.totalorder %s46, %s47
      %p58 = scmp.eq.s32.totalorder %s17, 0
      %p59 = por %p57, %p58
      %p60 = scmp.ne.s32.totalorder %s46, %s47
      %p61 = scmp.eq.s32.totalorder %s18, 7
      %p62 = por %p60, %p61
      %p64 = scmp.ne.s32.totalorder %s47, %s63
      %p65 = scmp.eq.s32.totalorder %s18, 0
      %p66 = por %p64, %p65
      %s67 = ssub.s32 %s19, %s38
      %s68 = ssub.s32 %s21, %s30
      %s69 = sor.u32 %s67, %s68
      %p70 = scmp.eq.s32.totalorder %s69, 0
      %s72 = sadd.s32 %s71, 1
      %s73 = scalar_select %p70, %s71, %s72
      %p76 = pneg %p70
      %p77 = scmp.eq.s32.totalorder %s12, 7
      %p78 = por %p76, %p77
      %p79 = scmp.ne.s32.totalorder %s71, %s74
      %p80 = scmp.eq.s32.totalorder %s12, 0
      %p81 = por %p79, %p80
      %p82 = scmp.ne.s32.totalorder %s71, %s74
      %p83 = scmp.eq.s32.totalorder %s17, 7
      %p84 = por %p82, %p83
      %p85 = scmp.ne.s32.totalorder %s74, %s75
      %p86 = scmp.eq.s32.totalorder %s17, 0
      %p87 = por %p85, %p86
      %p88 = scmp.ne.s32.totalorder %s74, %s75
      %p89 = scmp.eq.s32.totalorder %s18, 7
      %p90 = por %p88, %p89
      %p92 = scmp.ne.s32.totalorder %s75, %s91
      %p93 = scmp.eq.s32.totalorder %s18, 0
      %p94 = por %p92, %p93
      %s95 = ssub.s32 %s19, %s38
      %s96 = ssub.s32 %s21, %s30
      %s97 = sor.u32 %s95, %s96
      %p98 = scmp.eq.s32.totalorder %s97, 0
      %s100 = sadd.s32 %s99, 1
      %s101 = scalar_select %p98, %s99, %s100
      %p104 = pneg %p98
      %p105 = scmp.eq.s32.totalorder %s12, 7
      %p106 = por %p104, %p105
      %p107 = scmp.ne.s32.totalorder %s99, %s102
      %p108 = scmp.eq.s32.totalorder %s12, 0
      %p109 = por %p107, %p108
      %p110 = scmp.ne.s32.totalorder %s99, %s102
      %p111 = scmp.eq.s32.totalorder %s17, 7
      %p112 = por %p110, %p111
      %p113 = scmp.ne.s32.totalorder %s102, %s103
      %p114 = scmp.eq.s32.totalorder %s17, 0
      %p115 = por %p113, %p114
      %p116 = scmp.ne.s32.totalorder %s102, %s103
      %p117 = scmp.eq.s32.totalorder %s18, 7
      %p118 = por %p116, %p117
      %p120 = scmp.ne.s32.totalorder %s103, %s119
      %p121 = scmp.eq.s32.totalorder %s18, 0
      %p122 = por %p120, %p121
      %s123 = ssub.s32 %s19, %s38
      %s124 = ssub.s32 %s20, %s34
      %s125 = sor.u32 %s123, %s124
      %p126 = scmp.eq.s32.totalorder %s125, 0
      %s128 = sadd.s32 %s127, 1
      %s129 = scalar_select %p126, %s127, %s128
      %p132 = pneg %p126
      %p133 = scmp.eq.s32.totalorder %s12, 7
      %p134 = por %p132, %p133
      %p135 = scmp.ne.s32.totalorder %s127, %s130
      %p136 = scmp.eq.s32.totalorder %s12, 0
      %p137 = por %p135, %p136
      %p138 = scmp.ne.s32.totalorder %s127, %s130
      %p139 = scmp.eq.s32.totalorder %s17, 7
      %p140 = por %p138, %p139
      %p141 = scmp.ne.s32.totalorder %s130, %s131
      %p142 = scmp.eq.s32.totalorder %s17, 0
      %p143 = por %p141, %p142
      %p144 = scmp.ne.s32.totalorder %s130, %s131
      %p145 = scmp.eq.s32.totalorder %s18, 7
      %p146 = por %p144, %p145
      %p148 = scmp.ne.s32.totalorder %s131, %s147
      %p149 = scmp.eq.s32.totalorder %s18, 0
      %p150 = por %p148, %p149
      %p151 = scmp.le.s32.totalorder 1, %s12
      %p152 = scmp.lt.s32.totalorder %s12, 9
      %p153 = pnand %p151, %p152
      %p154 = pneg %p153
      // Predicated region
      $region9: #{tpu_custom_call.1} parent=5 // pred_check
        _
      $region10: #{tpu_custom_call.1} parent=5 // pred_check_branch
        %156 = sbr.rel (%p153) target = $region12
      $region11: #{tpu_custom_call.1} parent=5 // pred_region
        %s157 = ssub.s32 %s12, 1
      $region12: #{tpu_custom_call.1} parent=5 // pred_fallthru
        _
      %p158 = scmp.lt.s32.totalorder %s12, 8
      // Predicated region
      $region13: #{tpu_custom_call.1} parent=5 // pred_check
        %p159 = pneg %p158
      $region14: #{tpu_custom_call.1} parent=5 // pred_check_branch
        %161 = sbr.rel (%p159) target = $region16
      $region15: #{tpu_custom_call.1} parent=5 // pred_region
        // Predicated region
        $region17: #{tpu_custom_call.1} parent=15 // pred_check
          %p162 = pneg %p53
        $region18: #{tpu_custom_call.1} parent=15 // pred_check_branch
          %164 = sbr.rel (%p162) target = $region20
        $region19: #{tpu_custom_call.1} parent=15 // pred_region
          %s165 = smul.u32 2, %s20
          %p166 = scmp.lt.s32.totalorder %s19, 1
          %s167 = scalar_select %p166, %s19, 1
          %p168 = scmp.lt.s32.totalorder %s165, 3
          %s169 = scalar_select %p168, %s165, 3
          %s170 = smul.addr %s167, 4
          %s171 = sadd.s32 %s169, %s170
          %s172 = smul.addr %s171, 8
          %s173 = scalar_lea.vmem %s0, %s172
          %s174 = smul.u32 2, %s20
        $region20: #{tpu_custom_call.1} parent=15 // pred_fallthru
          _
        // Predicated region
        $region21: #{tpu_custom_call.1} parent=15 // pred_check
          %p175 = pneg %p81
        $region22: #{tpu_custom_call.1} parent=15 // pred_check_branch
          %177 = sbr.rel (%p175) target = $region24
        $region23: #{tpu_custom_call.1} parent=15 // pred_region
          %s178 = sand.u32 %s71, 1
          %s179 = sand.u32 %s71, 1
          %s180 = smul.addr %s179, 32
          %s181 = scalar_lea.vmem [#allocation3], %s180
          %s182 = smul.addr %s19, 8
          %s183 = sadd.s32 %s21, %s182
          %s184 = smul.addr %s183, 8
          %s185 = scalar_lea.vmem %s1, %s184
          // Predicated region
          $region25: #{tpu_custom_call.1} parent=23 // pred_check
            _
          $region26: #{tpu_custom_call.1} parent=23 // pred_check_branch
            %187 = sbr.rel (0) target = $region28
          $region27: #{tpu_custom_call.1} parent=23 // pred_region
            // Predicated region
            $region29: #{tpu_custom_call.1} parent=27 // pred_check
              _
            $region30: #{tpu_custom_call.1} parent=27 // pred_check_branch
              %189 = sbr.rel (0) target = $region32
            $region31: #{tpu_custom_call.1} parent=27 // pred_region
              // Predicated region
              $region44: #{tpu_custom_call.1} parent=31 // pred_check
                _
              $region45: #{tpu_custom_call.1} parent=31 // pred_check_branch
                %211 = sbr.rel (0) target = $region47
              $region46: #{tpu_custom_call.1} parent=31 // pred_region
                loop: start=0, step=1, limit=1
                $region48: #{tpu_custom_call.1} parent=46 // loop_pre_header
                  _
                $region49: #{tpu_custom_call.1} parent=46 // loop_header
                  %s213 = sphi 0, %s217
                  %p214 = scmp.ge.s32.totalorder %s213, 1
                  %s218 = sphi %s185, %s185
                  %s219 = sphi %s181, %s181
                $region50: #{tpu_custom_call.1} parent=46 // loop_header_branch
                  %216 = sbr.rel (%p214) target = $region54
                $region51: #{tpu_custom_call.1} parent=46 // loop_body
                  %v220 = vld [vmem:[%s218] sm:$0xff]
                  %221 = vst [vmem:[%s219] sm:$0xff] %v220
                  %v222 = vld [vmem:[%s218 + $0x10] sm:$0xff]
                  %223 = vst [vmem:[%s219 + $0x8] sm:$0xff] %v222
                  %v224 = vld [vmem:[%s218 + $0x20] sm:$0xff]
                  %225 = vst [vmem:[%s219 + $0x10] sm:$0xff] %v224
                  %v226 = vld [vmem:[%s218 + $0x30] sm:$0xff]
                  %227 = vst [vmem:[%s219 + $0x18] sm:$0xff] %v226
                $region52: #{tpu_custom_call.1} parent=46 // loop_footer
                  %s217 = sadd.s32 1, %s213
                $region53: #{tpu_custom_call.1} parent=46 // loop_footer_branch
                  %212 = sbr.rel target = $region49
                $region54: #{tpu_custom_call.1} parent=46 // loop_exit
                  _
              $region47: #{tpu_custom_call.1} parent=31 // pred_fallthru
                _
              // Predicated region
              $region55: #{tpu_custom_call.1} parent=31 // pred_check
                _
              $region56: #{tpu_custom_call.1} parent=31 // pred_check_branch
                %229 = sbr.rel target = $region58
              $region57: #{tpu_custom_call.1} parent=31 // pred_region
                _
              $region58: #{tpu_custom_call.1} parent=31 // pred_fallthru
                _
            $region32: #{tpu_custom_call.1} parent=27 // pred_fallthru
              _
            // Predicated region
            $region33: #{tpu_custom_call.1} parent=27 // pred_check
              _
            $region34: #{tpu_custom_call.1} parent=27 // pred_check_branch
              %191 = sbr.rel target = $region36
            $region35: #{tpu_custom_call.1} parent=27 // pred_region
              %s193 = ssub.s32 256, 1
              loop: start=0, step=1, limit=1
              $region37: #{tpu_custom_call.1} parent=35 // loop_pre_header
                _
              $region38: #{tpu_custom_call.1} parent=35 // loop_header
                %s195 = sphi 0, %s199
                %p196 = scmp.ge.s32.totalorder %s195, 1
                %s200 = sphi %s185, %s185
                %s201 = sphi %s181, %s181
              $region39: #{tpu_custom_call.1} parent=35 // loop_header_branch
                %198 = sbr.rel (%p196) target = $region43
              $region40: #{tpu_custom_call.1} parent=35 // loop_body
                %v202 = vld [vmem:[%s200] sm:%s193]
                %203 = vst [vmem:[%s201] sm:%s193] %v202
                %v204 = vld [vmem:[%s200 + $0x10] sm:%s193]
                %205 = vst [vmem:[%s201 + $0x8] sm:%s193] %v204
                %v206 = vld [vmem:[%s200 + $0x20] sm:%s193]
                %207 = vst [vmem:[%s201 + $0x10] sm:%s193] %v206
                %v208 = vld [vmem:[%s200 + $0x30] sm:%s193]
                %209 = vst [vmem:[%s201 + $0x18] sm:%s193] %v208
              $region41: #{tpu_custom_call.1} parent=35 // loop_footer
                %s199 = sadd.s32 1, %s195
              $region42: #{tpu_custom_call.1} parent=35 // loop_footer_branch
                %194 = sbr.rel target = $region38
              $region43: #{tpu_custom_call.1} parent=35 // loop_exit
                _
            $region36: #{tpu_custom_call.1} parent=27 // pred_fallthru
              _
          $region28: #{tpu_custom_call.1} parent=23 // pred_fallthru
            _
          %230 = vnop
        $region24: #{tpu_custom_call.1} parent=15 // pred_fallthru
          _
        // Predicated region
        $region59: #{tpu_custom_call.1} parent=15 // pred_check
          %p231 = pneg %p109
        $region60: #{tpu_custom_call.1} parent=15 // pred_check_branch
          %233 = sbr.rel (%p231) target = $region62
        $region61: #{tpu_custom_call.1} parent=15 // pred_region
          %s234 = smul.u32 16, %s21
          %p235 = scmp.lt.s32.totalorder %s19, 1
          %s236 = scalar_select %p235, %s19, 1
          %p237 = scmp.lt.s32.totalorder %s234, 31
          %s238 = scalar_select %p237, %s234, 31
          %s239 = smul.addr %s236, 32
          %s240 = sadd.s32 %s238, %s239
          %s241 = smul.addr %s240, 8
          %s242 = scalar_lea.vmem %s2, %s241
          %s243 = smul.u32 16, %s21
        $region62: #{tpu_custom_call.1} parent=15 // pred_fallthru
          _
      $region16: #{tpu_custom_call.1} parent=5 // pred_fallthru
        _
      %p244 = scmp.le.s32.totalorder 1, %s12
      %p245 = scmp.lt.s32.totalorder %s12, 9
      %p246 = pnand %p244, %p245
      %p247 = pneg %p246
      // Predicated region
      $region63: #{tpu_custom_call.1} parent=5 // pred_check
        _
      $region64: #{tpu_custom_call.1} parent=5 // pred_check_branch
        %249 = sbr.rel (%p246) target = $region66
      $region65: #{tpu_custom_call.1} parent=5 // pred_region
        %s250 = ssub.s32 %s12, 1
        %s251 = sand.u32 %s74, 1
        %s252 = sand.u32 %s74, 1
        %s253 = smul.addr %s252, 32
        %s254 = scalar_lea.vmem [#allocation3], %s253
        // Predicated region
        $region67: #{tpu_custom_call.1} parent=65 // pred_check
          %p255 = pneg %p87
        $region68: #{tpu_custom_call.1} parent=65 // pred_check_branch
          %257 = sbr.rel (%p255) target = $region70
        $region69: #{tpu_custom_call.1} parent=65 // pred_region
          _
        $region70: #{tpu_custom_call.1} parent=65 // pred_fallthru
          _
        %s258 = smul.u32 2, %s23
        %p259 = scmp.lt.s32.totalorder %s22, 1
        %s260 = scalar_select %p259, %s22, 1
        %p261 = scmp.lt.s32.totalorder %s258, 3
        %s262 = scalar_select %p261, %s258, 3
        %s263 = smul.addr %s260, 4
        %s264 = sadd.s32 %s262, %s263
        %s265 = smul.addr %s264, 8
        %s266 = scalar_lea.vmem %s0, %s265
        %p267 = pneg %p59
        %p268 = pneg %p56
        %s269 = sand.u32 %s74, 1
        %s270 = sand.u32 %s74, 1
        %s271 = smul.addr %s270, 32
        %s272 = scalar_lea.vmem [#allocation3], %s271
        %p273 = pneg %p87
        %p274 = pneg %p84
        %s275 = smul.u32 16, %s24
        %p276 = scmp.lt.s32.totalorder %s22, 1
        %s277 = scalar_select %p276, %s22, 1
        %p278 = scmp.lt.s32.totalorder %s275, 31
        %s279 = scalar_select %p278, %s275, 31
        %s280 = smul.addr %s277, 32
        %s281 = sadd.s32 %s279, %s280
        %s282 = smul.addr %s281, 8
        %s283 = scalar_lea.vmem %s2, %s282
        %p284 = pneg %p115
        %p285 = pneg %p112
        %p286 = pneg %p143
        %p287 = pneg %p140
        %s288 = sand.u32 %s130, 1
        %s289 = scalar_lea.sflag [#allocation5], %s288
        %s290 = sand.u32 %s130, 1
        %s291 = smul.addr %s290, 16
        %s292 = scalar_lea.vmem [#allocation4], %s291
        %s293 = smul.u32 2, %s23
        %p294 = scmp.lt.s32.totalorder %s22, 1
        %s295 = scalar_select %p294, %s22, 1
        %p296 = scmp.lt.s32.totalorder %s293, 3
        %s297 = scalar_select %p296, %s293, 3
        %s298 = smul.addr %s295, 4
        %s299 = sadd.s32 %s297, %s298
        %s300 = smul.addr %s299, 8
        %s301 = scalar_lea.vmem %s0, %s300
        %s302 = smul.u32 2, %s23
        %s303 = smul.u32 16, %s24
        %p304 = scmp.lt.s32.totalorder %s22, 1
        %s305 = scalar_select %p304, %s22, 1
        %p306 = scmp.lt.s32.totalorder %s303, 31
        %s307 = scalar_select %p306, %s303, 31
        %s308 = smul.addr %s305, 32
        %s309 = sadd.s32 %s307, %s308
        %s310 = smul.addr %s309, 8
        %s311 = scalar_lea.vmem %s2, %s310
        %s312 = smul.u32 16, %s24
        %s313 = smul.u32 2, %s23
        %p314 = scmp.eq.s32.totalorder %s24, 0
        // Predicated region
        $region71: #{tpu_custom_call.1} parent=65 // pred_check
          %p315 = pneg %p314
        $region72: #{tpu_custom_call.1} parent=65 // pred_check_branch
          %317 = sbr.rel (%p315) target = $region74
        $region73: #{tpu_custom_call.1} parent=65 // pred_region
          %vm318 = vcmask 261120
          %319 = vst.msk [vmem:[#allocation2] sm:$0xff] %vm318, 0.0
          %320 = vst.msk [vmem:[#allocation2 + $0x8] sm:$0xff] %vm318, 0.0
        $region74: #{tpu_custom_call.1} parent=65 // pred_fallthru
          _
        %v321 = vld [vmem:[%s301] sm:$0xff]
        %v322 = vld [vmem:[%s301 + $0x8] sm:$0xff]
        %v323 = vld [vmem:[%s254] sm:$0xff]
        %v324 = vld [vmem:[%s254 + $0x8] sm:$0xff]
        %v325 = vld [vmem:[%s254 + $0x10] sm:$0xff]
        %v326 = vld [vmem:[%s254 + $0x18] sm:$0xff]
        %vm327 = vcmask 261120
        %v329 = vsel %vm327, %v321, 0
        %v332 = vsel %vm327, %v322, 0
        %334 = vmatprep.subr.mxu0 0.0
        %335 = vmatpush1.msra.mxu0 0.0
        %336 = vmatprep.subr.mxu0 0.0
        %337 = vmatpush1.msra.mxu0 0.0
        %338 = vmatprep.subr.mxu0 0.0
        %339 = vmatpush1.msra.mxu0 0.0
        %340 = vmatprep.subr.mxu0 0.0
        %341 = vmatpush1.msra.mxu0 0.0
        %342 = vmatprep.subr.mxu0 0.0
        %343 = vmatpush1.msra.mxu0 0.0
        %344 = vmatprep.subr.mxu0 0.0
        %345 = vmatpush1.msra.mxu0 0.0
        %346 = vmatprep.subr.mxu0 0.0
        %347 = vmatpush1.msra.mxu0 0.0
        %348 = vmatprep.subr.mxu0 0.0
        %349 = vmatpush1.msra.mxu0 0.0
        %350 = vmatprep.subr.mxu0 0.0
        %351 = vmatpush1.msra.mxu0 0.0
        %352 = vmatprep.subr.mxu0 0.0
        %353 = vmatpush1.msra.mxu0 0.0
        %354 = vmatprep.subr.mxu0 0.0
        %355 = vmatpush1.msra.mxu0 0.0
        %356 = vmatprep.subr.mxu0 0.0
        %357 = vmatpush1.msra.mxu0 0.0
        %358 = vmatprep.subr.mxu0 0.0
        %359 = vmatpush1.msra.mxu0 %v326
        %360 = vmatprep.subr.mxu0 0.0
        %361 = vmatpush1.msra.mxu0 %v325
        %362 = vmatprep.subr.mxu0 0.0
        %363 = vmatpush1.msra.mxu0 %v324
        %364 = vmatprep.subr.mxu0 0.0
        %365 = vmatpush1.msra.mxu0 %v323
        %366 = vmatprep.subr.mxu0 0.0
        %367 = vmatpush2.msra.mxu0 0.0
        %368 = vmatprep.subr.mxu0 0.0
        %369 = vmatpush2.msra.mxu0 0.0
        %370 = vmatprep.subr.mxu0 0.0
        %371 = vmatpush2.msra.mxu0 0.0
        %372 = vmatprep.subr.mxu0 0.0
        %373 = vmatpush2.msra.mxu0 0.0
        %374 = vmatprep.subr.mxu0 0.0
        %375 = vmatpush2.msra.mxu0 0.0
        %376 = vmatprep.subr.mxu0 0.0
        %377 = vmatpush2.msra.mxu0 0.0
        %378 = vmatprep.subr.mxu0 0.0
        %379 = vmatpush2.msra.mxu0 0.0
        %380 = vmatprep.subr.mxu0 0.0
        %381 = vmatpush2.msra.mxu0 0.0
        %382 = vmatprep.subr.mxu0 0.0
        %383 = vmatpush2.msra.mxu0 0.0
        %384 = vmatprep.subr.mxu0 0.0
        %385 = vmatpush2.msra.mxu0 0.0
        %386 = vmatprep.subr.mxu0 0.0
        %387 = vmatpush2.msra.mxu0 0.0
        %388 = vmatprep.subr.mxu0 0.0
        %389 = vmatpush2.msra.mxu0 0.0
        %390 = vmatprep.subr.mxu0 0.0
        %391 = vmatpush2.msra.mxu0 0.0
        %392 = vmatprep.subr.mxu0 0.0
        %393 = vmatpush2.msra.mxu0 0.0
        %394 = vmatprep.subr.mxu0 0.0
        %395 = vmatpush2.msra.mxu0 0.0
        %396 = vmatprep.subr.mxu0 0.0
        %397 = vmatpush2.msra.mxu0 0.0
        %398 = vmatprep.mubr.f32.mxu0 0.0
        %399 = vmatmul.mubr.f32.gmra.mxu0 %v329
        %v400 = vpop.f32.mrf.mxu0
        %v401 = vadd.f32 0.0, %v400
        %v402 = vpop.f32.mrf.mxu0
        %403 = vmatprep.mubr.f32.mxu0 0.0
        %404 = vmatmul.mubr.f32.gmra.mxu0 %v332
        %v405 = vpop.f32.mrf.mxu0
        %v406 = vadd.f32 0.0, %v405
        %v407 = vpop.f32.mrf.mxu0
        %408 = vdwg.mxu0
        %v409 = vmul.f32 %v401, 0.5
        %v410 = vmul.f32 %v406, 0.5
        %v411 = vmul.f32 %v401, 0.044715
        %v412 = vmul.f32 %v406, 0.044715
        %v413 = vmul.f32 %v411, %v401
        %v414 = vmul.f32 %v412, %v406
        %v415 = vmul.f32 %v413, %v401
        %v416 = vmul.f32 %v414, %v406
        %v417 = vadd.f32 %v401, %v415
        %v418 = vadd.f32 %v406, %v416
        %v419 = vmul.f32 %v417, 0.7978846
        %v420 = vmul.f32 %v418, 0.7978846
        %v421 = vtanh.pop %v419
        %v422 = vtanh.pop %v420
        %v423 = vadd.f32 %v421, 1.0
        %v424 = vadd.f32 %v422, 1.0
        %v425 = vmul.f32 %v409, %v423
        %v426 = vmul.f32 %v410, %v424
        %v427 = vld [vmem:[#allocation2] sm:$0xff]
        %v428 = vld [vmem:[#allocation2 + $0x8] sm:$0xff]
        %v429 = vld [vmem:[%s311] sm:$0xff]
        %v430 = vld [vmem:[%s311 + $0x8] sm:$0xff]
        %v431 = vld [vmem:[%s311 + $0x10] sm:$0xff]
        %v432 = vld [vmem:[%s311 + $0x18] sm:$0xff]
        %v433 = vld [vmem:[%s311 + $0x20] sm:$0xff]
        %v434 = vld [vmem:[%s311 + $0x28] sm:$0xff]
        %v435 = vld [vmem:[%s311 + $0x30] sm:$0xff]
        %v436 = vld [vmem:[%s311 + $0x38] sm:$0xff]
        %v437 = vld [vmem:[%s311 + $0x40] sm:$0xff]
        %v438 = vld [vmem:[%s311 + $0x48] sm:$0xff]
        %v439 = vld [vmem:[%s311 + $0x50] sm:$0xff]
        %v440 = vld [vmem:[%s311 + $0x58] sm:$0xff]
        %v441 = vld [vmem:[%s311 + $0x60] sm:$0xff]
        %v442 = vld [vmem:[%s311 + $0x68] sm:$0xff]
        %v443 = vld [vmem:[%s311 + $0x70] sm:$0xff]
        %v444 = vld [vmem:[%s311 + $0x78] sm:$0xff]
        %445 = vmatprep.subr.mxu0 0.0
        %446 = vmatpush1.msra.mxu0 %v444
        %447 = vmatprep.subr.mxu0 0.0
        %448 = vmatpush1.msra.mxu0 %v443
        %449 = vmatprep.subr.mxu0 0.0
        %450 = vmatpush1.msra.mxu0 %v442
        %451 = vmatprep.subr.mxu0 0.0
        %452 = vmatpush1.msra.mxu0 %v441
        %453 = vmatprep.subr.mxu0 0.0
        %454 = vmatpush1.msra.mxu0 %v440
        %455 = vmatprep.subr.mxu0 0.0
        %456 = vmatpush1.msra.mxu0 %v439
        %457 = vmatprep.subr.mxu0 0.0
        %458 = vmatpush1.msra.mxu0 %v438
        %459 = vmatprep.subr.mxu0 0.0
        %460 = vmatpush1.msra.mxu0 %v437
        %461 = vmatprep.subr.mxu0 0.0
        %462 = vmatpush1.msra.mxu0 %v436
        %463 = vmatprep.subr.mxu0 0.0
        %464 = vmatpush1.msra.mxu0 %v435
        %465 = vmatprep.subr.mxu0 0.0
        %466 = vmatpush1.msra.mxu0 %v434
        %467 = vmatprep.subr.mxu0 0.0
        %468 = vmatpush1.msra.mxu0 %v433
        %469 = vmatprep.subr.mxu0 0.0
        %470 = vmatpush1.msra.mxu0 %v432
        %471 = vmatprep.subr.mxu0 0.0
        %472 = vmatpush1.msra.mxu0 %v431
        %473 = vmatprep.subr.mxu0 0.0
        %474 = vmatpush1.msra.mxu0 %v430
        %475 = vmatprep.subr.mxu0 0.0
        %476 = vmatpush1.msra.mxu0 %v429
        %477 = vmatprep.subr.mxu0 0.0
        %478 = vmatpush2.msra.mxu0 0.0
        %479 = vmatprep.subr.mxu0 0.0
        %480 = vmatpush2.msra.mxu0 0.0
        %481 = vmatprep.subr.mxu0 0.0
        %482 = vmatpush2.msra.mxu0 0.0
        %483 = vmatprep.subr.mxu0 0.0
        %484 = vmatpush2.msra.mxu0 0.0
        %485 = vmatprep.subr.mxu0 0.0
        %486 = vmatpush2.msra.mxu0 0.0
        %487 = vmatprep.subr.mxu0 0.0
        %488 = vmatpush2.msra.mxu0 0.0
        %489 = vmatprep.subr.mxu0 0.0
        %490 = vmatpush2.msra.mxu0 0.0
        %491 = vmatprep.subr.mxu0 0.0
        %492 = vmatpush2.msra.mxu0 0.0
        %493 = vmatprep.subr.mxu0 0.0
        %494 = vmatpush2.msra.mxu0 0.0
        %495 = vmatprep.subr.mxu0 0.0
        %496 = vmatpush2.msra.mxu0 0.0
        %497 = vmatprep.subr.mxu0 0.0
        %498 = vmatpush2.msra.mxu0 0.0
        %499 = vmatprep.subr.mxu0 0.0
        %500 = vmatpush2.msra.mxu0 0.0
        %501 = vmatprep.subr.mxu0 0.0
        %502 = vmatpush2.msra.mxu0 0.0
        %503 = vmatprep.subr.mxu0 0.0
        %504 = vmatpush2.msra.mxu0 0.0
        %505 = vmatprep.subr.mxu0 0.0
        %506 = vmatpush2.msra.mxu0 0.0
        %507 = vmatprep.subr.mxu0 0.0
        %508 = vmatpush2.msra.mxu0 0.0
        %509 = vmatprep.mubr.f32.mxu0 0.0
        %510 = vmatmul.mubr.f32.gmra.mxu0 %v425
        %v511 = vpop.f32.mrf.mxu0
        %v512 = vadd.f32 0.0, %v511
        %v513 = vpop.f32.mrf.mxu0
        %514 = vmatprep.mubr.f32.mxu0 0.0
        %515 = vmatmul.mubr.f32.gmra.mxu0 %v426
        %v516 = vpop.f32.mrf.mxu0
        %v517 = vadd.f32 0.0, %v516
        %v518 = vpop.f32.mrf.mxu0
        %519 = vdwg.mxu0
        %v520 = vadd.f32 %v427, %v512
        %v521 = vadd.f32 %v428, %v517
        %522 = vst.msk [vmem:[#allocation2] sm:$0xff] %vm327, %v520
        %523 = vst.msk [vmem:[#allocation2 + $0x8] sm:$0xff] %vm327, %v521
        %p524 = scmp.eq.s32.totalorder %s24, 1
        // Predicated region
        $region75: #{tpu_custom_call.1} parent=65 // pred_check
          %p525 = pneg %p524
        $region76: #{tpu_custom_call.1} parent=65 // pred_check_branch
          %527 = sbr.rel (%p525) target = $region78
        $region77: #{tpu_custom_call.1} parent=65 // pred_region
          %v528 = vld [vmem:[#allocation2] sm:$0xff]
          %v529 = vld [vmem:[#allocation2 + $0x8] sm:$0xff]
          %530 = vst.msk [vmem:[%s292] sm:$0xff] %vm327, %v528
          %531 = vst.msk [vmem:[%s292 + $0x8] sm:$0xff] %vm327, %v529
        $region78: #{tpu_custom_call.1} parent=65 // pred_fallthru
          _
        %s532 = sand.u32 %s130, 1
        %s533 = scalar_lea.sflag [#allocation5], %s532
        %s534 = sand.u32 %s130, 1
        %s535 = smul.addr %s534, 16
        %s536 = scalar_lea.vmem [#allocation4], %s535
        // Predicated region
        $region79: #{tpu_custom_call.1} parent=65 // pred_check
          %p537 = pneg %p140
        $region80: #{tpu_custom_call.1} parent=65 // pred_check_branch
          %539 = sbr.rel (%p537) target = $region82
        $region81: #{tpu_custom_call.1} parent=65 // pred_region
          %s540 = smul.u32 2, %s23
          %s542 = ssub.s32 256, 256
          %543 = vsyncadd %s533, %s542
          %s544 = smul.addr %s22, 4
          %s545 = sadd.s32 %s540, %s544
          %s546 = smul.addr %s545, 128
          %s547 = scalar_lea.hbm %s3, %s546
          %s548 = sshll.u32 %s536, 4
          %s549 = int_to_ptr.vmem [resolvable:$true] %s548
          %554 = dma.vmem_to_hbm [thread:$0]  %s549, 256, %s547, %s533, 128, 128, 8
        $region82: #{tpu_custom_call.1} parent=65 // pred_fallthru
          _
      $region66: #{tpu_custom_call.1} parent=5 // pred_fallthru
        _
      %p555 = scmp.le.s32.totalorder 2, %s12
      // Predicated region
      $region83: #{tpu_custom_call.1} parent=5 // pred_check
        %p556 = pneg %p555
      $region84: #{tpu_custom_call.1} parent=5 // pred_check_branch
        %558 = sbr.rel (%p556) target = $region86
      $region85: #{tpu_custom_call.1} parent=5 // pred_region
        %s559 = ssub.s32 %s12, 2
        // Predicated region
        $region87: #{tpu_custom_call.1} parent=85 // pred_check
          %p560 = pneg %p146
        $region88: #{tpu_custom_call.1} parent=85 // pred_check_branch
          %562 = sbr.rel (%p560) target = $region90
        $region89: #{tpu_custom_call.1} parent=85 // pred_region
          %s563 = sand.u32 %s131, 1
          %s564 = scalar_lea.sflag [#allocation5], %s563
          %s565 = sand.u32 %s131, 1
          %s566 = smul.addr %s565, 16
          %s567 = scalar_lea.vmem [#allocation4], %s566
          %568 = dma.done %s564, 256
        $region90: #{tpu_custom_call.1} parent=85 // pred_fallthru
          _
      $region86: #{tpu_custom_call.1} parent=5 // pred_fallthru
        _
    $region6: #{tpu_custom_call.1} parent=1 // loop_footer
      %s16 = sadd.s32 1, %s12
    $region7: #{tpu_custom_call.1} parent=1 // loop_footer_branch
      %11 = sbr.rel target = $region3
    $region8: #{tpu_custom_call.1} parent=1 // loop_exit
      _
    %569 = vsyncpa [#allocation5], 1
    %s570 = scalar_lea.sflag [#allocation5], 1
    %571 = vsyncpa %s570, 1

</llo_original>
